<compile_context>
chip_gen: v7x
topology: tpu7x:2x2x1
jax: 0.10.0
libtpu: 0.0.40
codegen_flags: <defaults>
</compile_context>

<pallas_src>
import functools

import jax
import jax.numpy as jnp
from jax.experimental import pallas as pl
from jax.experimental.pallas import tpu as pltpu

MIN_VAL = float(jnp.finfo(jnp.float32).min)   # torch.finfo(torch.float).min
NEG_INF = float("-inf")
LN_EPS = 1e-5


def _round_up(x, m):
    return ((x + m - 1) // m) * m


def _tensorcores_per_chip():
    """Best-effort TensorCore count (2 on v7x, 1 on v5e/v6e). Perf-only; defaults to 1."""
    try:
        info = pltpu.get_tpu_info()
        for name in ("num_tensorcores", "tensorcore_count", "num_cores", "cores_per_chip"):
            v = getattr(info, name, None)
            if v:
                return max(1, int(v))
    except Exception:
        pass
    try:
        kind = jax.devices()[0].device_kind.lower()
        if "v7" in kind or "7x" in kind:
            return 2
    except Exception:
        pass
    return 1


def _choose_batch_tile(b8, num_cores, cap=512):
    """Multiple-of-8 batch tile.  Prefers a divisor of b8 (no obs pad copy); never
    splits a resident tile on single-TC chips (v5e/v6e); on multi-TC chips (v7x)
    targets >= 2 grid steps per core so each core keeps prefetch/writeback overlap."""
    cap = min(cap, b8)
    best = 8
    for t in range(8, cap + 1, 8):
        if b8 % t == 0:
            best = t
    tb = best
    if tb < 64 and b8 > cap >= 64:
        tb = cap                      # tiny divisors on a big batch: pad instead
    if num_cores > 1:
        want = 2 * num_cores          # >= 2 steps per TensorCore
        if b8 // tb < want and b8 >= want * 8:
            limit = b8 // want
            best = 8
            for t in range(8, limit + 1, 8):
                if b8 % t == 0:
                    best = t
            tb = best
    return tb


def actor_mlp_kernel(apply_mask, in_pad, hidden, hidden_pad, output_dim, *refs):
    """[Linear -> LayerNorm -> ReLU] x2 -> Linear -> (mask-fill -> softmax)."""
    if apply_mask:
        obs_ref, mask_ref, w12_ref, vec_ref, w3b3_ref, out_ref = refs
    else:
        obs_ref, w12_ref, vec_ref, w3b3_ref, out_ref = refs

    hp = hidden_pad
    inv_h = 1.0 / float(hidden)            # python literal, not a captured constant
    out_pad = out_ref.shape[-1]

    # Static-offset views into the coalesced parameter slabs (no extra DMAs).
    w1 = w12_ref[:in_pad, :]
    w2 = w12_ref[in_pad:in_pad + hp, :]
    vec = vec_ref[...]                      # (8, hp): b1, g1, be1, b2, g2, be2, 0, 0
    b1, g1, be1 = vec[0:1, :], vec[1:2, :], vec[2:3, :]
    b2, g2, be2 = vec[3:4, :], vec[4:5, :], vec[5:6, :]
    w3 = w3b3_ref[:hp, :]
    b3 = w3b3_ref[hp:hp + 1, :].astype(jnp.float32)

    lane_valid = None
    if hp != hidden:                        # hidden dim was lane-padded to 128
        lane = jax.lax.broadcasted_iota(jnp.int32, (1, hp), 1)
        lane_valid = lane < hidden

    def block(h, w, b, g, beta):
        # Linear (MXU, f32 accumulate) -> LayerNorm over the TRUE width -> ReLU, f32.
        lhs = h if w.dtype == jnp.float32 else h.astype(w.dtype)
        h = jnp.dot(lhs, w, preferred_element_type=jnp.float32) + b
        mu = jnp.sum(h, axis=-1, keepdims=True) * inv_h       # pad lanes are 0
        c = h - mu
        if lane_valid is not None:
            c = jnp.where(lane_valid, c, 0.0)                  # drop pad lanes from var
        var = jnp.sum(c * c, axis=-1, keepdims=True) * inv_h
        h = c * jax.lax.rsqrt(var + LN_EPS)
        return jnp.maximum(h * g + beta, 0.0)                  # gamma/beta pads = 0

    x = obs_ref[...].astype(jnp.float32)
    h = block(x, w1, b1, g1, be1)
    h = block(h, w2, b2, g2, be2)
    lhs = h if w3.dtype == jnp.float32 else h.astype(w3.dtype)
    logits = jnp.dot(lhs, w3, preferred_element_type=jnp.float32) + b3

    if apply_mask:
        valid = mask_ref[...] != 0
        masked = jnp.where(valid, logits, MIN_VAL)             # torch: x[~mask] = min_val
        if out_pad != output_dim:
            col = jax.lax.broadcasted_iota(jnp.int32, (1, out_pad), 1)
            masked = jnp.where(col < output_dim, masked, NEG_INF)  # pad lanes -> exp == 0
        m = jnp.max(masked, axis=-1, keepdims=True)
        e = jnp.exp(masked - m)
        inv = pl.reciprocal(jnp.sum(e, axis=-1, keepdims=True), approx=True)
        out_ref[...] = (e * inv).astype(out_ref.dtype)
    else:
        out_ref[...] = logits.astype(out_ref.dtype)


def actor_mlp_forward(params, obs, mask=None, *, param_dtype=jnp.float32):
    """Fused ActorMLP forward.  obs: (B, input_dim) f32; mask: (B, output_dim) bool or None."""
    B, input_dim = obs.shape
    H = params["w2"].shape[0]
    output_dim = params["w3"].shape[1]
    apply_mask = mask is not None

    IN_PAD = _round_up(input_dim, 8)                 # sublane-aligned w1/w2 slab split
    H_PAD = _round_up(H, 128)                        # lane-dense hidden activations
    OUT_PAD = _round_up(max(output_dim, 1), 128)     # lane-dense (unmasked vst) output

    # Batch tiling.
    num_cores = _tensorcores_per_chip()
    B8 = _round_up(B, 8)
    TB = _choose_batch_tile(B8, num_cores)
    B_pad = _round_up(B8, TB)
    grid = (B_pad // TB,)

    # obs: pad rows/cols only if actually needed (usually a no-op -> no extra HBM copy).
    obs_p = obs
    if B_pad != B or IN_PAD != input_dim:
        obs_p = jnp.pad(obs, ((0, B_pad - B), (0, IN_PAD - input_dim)))

    # Coalesced parameter slabs (3 weight DMAs, VMEM-resident via constant index_map).
    # Zero pads keep the math exact: zero weight rows/cols contribute nothing,
    # gamma/beta pads are zero, and LN stats divide by the true H inside the kernel.
    w1p = jnp.pad(params["w1"], ((0, IN_PAD - input_dim), (0, H_PAD - H)))
    w2p = jnp.pad(params["w2"], ((0, H_PAD - H), (0, H_PAD - H)))
    w12 = jnp.concatenate([w1p, w2p], axis=0).astype(param_dtype)      # (IN_PAD+H_PAD, H_PAD)

    vec = jnp.concatenate([params["b1"], params["g1"], params["be1"],
                           params["b2"], params["g2"], params["be2"],
                           jnp.zeros((2, H), jnp.float32)], axis=0)    # (8, H)
    vec = jnp.pad(vec, ((0, 0), (0, H_PAD - H)))                       # (8, H_PAD), f32

    w3p = jnp.pad(params["w3"], ((0, H_PAD - H), (0, OUT_PAD - output_dim)))
    b3p = jnp.pad(params["b3"], ((0, 0), (0, OUT_PAD - output_dim)))
    w3b3 = jnp.concatenate([w3p, b3p], axis=0).astype(param_dtype)     # (H_PAD+1, OUT_PAD)

    batched = lambda i: (i, 0)
    const = lambda i: (0, 0)   # same block every step -> weights stay VMEM-resident
    # NOTE: on v7x with large H, pipeline_mode=pl.Buffered(1) on the constant weight
    # specs would halve their VMEM footprint (64 MiB VMEM); left at default here.

    in_specs = [pl.BlockSpec((TB, IN_PAD), batched)]
    args = [obs_p]
    if apply_mask:
        # int8 mask tile (4x fewer bytes than an f32 bias); padded rows/cols are 0.
        m8 = jnp.pad(mask.astype(jnp.int8),
                     ((0, B_pad - B), (0, OUT_PAD - output_dim)))
        in_specs.append(pl.BlockSpec((TB, OUT_PAD), batched))
        args.append(m8)
    in_specs += [pl.BlockSpec(w12.shape, const),
                 pl.BlockSpec(vec.shape, const),
                 pl.BlockSpec(w3b3.shape, const)]
    args += [w12, vec, w3b3]

    fn = pl.pallas_call(
        functools.partial(actor_mlp_kernel, apply_mask, IN_PAD, H, H_PAD, output_dim),
        out_shape=jax.ShapeDtypeStruct((B_pad, OUT_PAD), jnp.float32),
        grid_spec=pltpu.PrefetchScalarGridSpec(
            num_scalar_prefetch=0,
            grid=grid,
            in_specs=in_specs,
            out_specs=pl.BlockSpec((TB, OUT_PAD), batched),
        ),
        compiler_params=pltpu.CompilerParams(
            dimension_semantics=("parallel",),
            vmem_limit_bytes=48 * 1024 * 1024,
        ),
    )
    out = fn(*args)
    # Slice away batch/action padding.
    return out[:B, :output_dim]


def init_params(key, input_dim, hidden_dim, output_dim):
    """Deterministic synthetic parameters (shapes match the torch module for n_layers=2)."""
    ks = jax.random.split(key, 12)
    sc = 0.1
    return {
        "w1": sc * jax.random.normal(ks[0], (input_dim, hidden_dim), jnp.float32),
        "b1": sc * jax.random.normal(ks[1], (1, hidden_dim), jnp.float32),
        "g1": 1.0 + sc * jax.random.normal(ks[2], (1, hidden_dim), jnp.float32),
        "be1": sc * jax.random.normal(ks[3], (1, hidden_dim), jnp.float32),
        "w2": sc * jax.random.normal(ks[4], (hidden_dim, hidden_dim), jnp.float32),
        "b2": sc * jax.random.normal(ks[5], (1, hidden_dim), jnp.float32),
        "g2": 1.0 + sc * jax.random.normal(ks[6], (1, hidden_dim), jnp.float32),
        "be2": sc * jax.random.normal(ks[7], (1, hidden_dim), jnp.float32),
        "w3": sc * jax.random.normal(ks[8], (hidden_dim, output_dim), jnp.float32),
        "b3": sc * jax.random.normal(ks[9], (1, output_dim), jnp.float32),
    }


def reference_forward(params, obs, mask=None):
    """Plain-JAX reference mirroring the torch module."""
    hp = jax.lax.Precision.HIGHEST

    def block(h, w, b, g, be):
        h = jnp.dot(h, w, precision=hp) + b
        mu = jnp.mean(h, axis=-1, keepdims=True)
        var = jnp.mean((h - mu) ** 2, axis=-1, keepdims=True)
        h = (h - mu) / jnp.sqrt(var + LN_EPS) * g + be
        return jnp.maximum(h, 0.0)

    h = block(obs, params["w1"], params["b1"], params["g1"], params["be1"])
    h = block(h, params["w2"], params["b2"], params["g2"], params["be2"])
    logits = jnp.dot(h, params["w3"], precision=hp) + params["b3"]
    if mask is None:
        return logits
    masked = jnp.where(mask, logits, MIN_VAL)
    return jax.nn.softmax(masked, axis=1)


if __name__ == "__main__":
    # small shapes consistent with the module: n_layers=2 (one extra hidden block)
    B, input_dim, hidden_dim, output_dim = 8, 16, 32, 12

    key = jax.random.PRNGKey(0)
    pkey, okey, mkey = jax.random.split(key, 3)

    params = init_params(pkey, input_dim, hidden_dim, output_dim)
    obs = jax.random.normal(okey, (B, input_dim), jnp.float32)
    # action mask: most rows have a valid action; row 1 is fully masked on purpose to
    # check the torch semantics (uniform 1/output_dim) are reproduced exactly.
    mask = jax.random.bernoulli(mkey, p=0.6, shape=(B, output_dim))
    mask = mask.at[:, 0].set(True)
    mask = mask.at[1, :].set(False)

    # masked path (masked_fill + softmax)
    out = jax.block_until_ready(actor_mlp_forward(params, obs, mask))
    ref = reference_forward(params, obs, mask)
    # tolerance loosened slightly for the EUP approx reciprocal in the softmax denom
    assert jnp.allclose(out, ref, atol=1e-3, rtol=1e-3), "masked path mismatch"

    # no-mask path (raw logits)
    out_nm = jax.block_until_ready(actor_mlp_forward(params, obs, None))
    ref_nm = reference_forward(params, obs, None)
    assert jnp.allclose(out_nm, ref_nm, atol=1e-4, rtol=1e-4), "no-mask path mismatch"

    # bf16 weight slabs (f32 accumulate / f32 LN & softmax math) — loose sanity check
    out_bf = jax.block_until_ready(
        actor_mlp_forward(params, obs, mask, param_dtype=jnp.bfloat16))
    assert float(jnp.max(jnp.abs(out_bf - ref))) < 5e-2, "bf16-weight path mismatch"

    print("KERNEL_OK")
</pallas_src>

<mosaic_0001>
module attributes {stable_mosaic.version = 11 : i64} {
  func.func @actor_mlp_kernel(%arg0: i32, %arg1: memref<8x16xf32, #tpu.memory_space<vmem>>, %arg2: memref<8x128xi8, #tpu.memory_space<vmem>>, %arg3: memref<144x128xf32, #tpu.memory_space<vmem>>, %arg4: memref<8x128xf32, #tpu.memory_space<vmem>>, %arg5: memref<129x128xf32, #tpu.memory_space<vmem>>, %arg6: memref<8x128xf32, #tpu.memory_space<vmem>>) attributes {dimension_semantics = [#tpu.dimension_semantics<parallel>], iteration_bounds = array<i64: 1>, scalar_prefetch = 0 : i64, scratch_operands = 0 : i64, tpu.core_type = #tpu.core_type<tc>, window_params = [{transform_indices = @transform_0, window_bounds = array<i64: 8, 16>}, {transform_indices = @transform_1, window_bounds = array<i64: 8, 128>}, {pipeline_mode = #tpu.pipeline_mode<synchronous>, transform_indices = @transform_2, window_bounds = array<i64: 144, 128>}, {pipeline_mode = #tpu.pipeline_mode<synchronous>, transform_indices = @transform_3, window_bounds = array<i64: 8, 128>}, {pipeline_mode = #tpu.pipeline_mode<synchronous>, transform_indices = @transform_4, window_bounds = array<i64: 129, 128>}, {transform_indices = @transform_5, window_bounds = array<i64: 8, 128>}]} {
    %c0 = arith.constant 0 : index
    %c0_0 = arith.constant 0 : index
    %0 = vector.load %arg3[%c0, %c0_0] : memref<144x128xf32, #tpu.memory_space<vmem>>, vector<16x128xf32>
    %c16 = arith.constant 16 : index
    %c0_1 = arith.constant 0 : index
    %1 = vector.load %arg3[%c16, %c0_1] : memref<144x128xf32, #tpu.memory_space<vmem>>, vector<128x128xf32>
    %c0_2 = arith.constant 0 : index
    %c0_3 = arith.constant 0 : index
    %2 = vector.load %arg4[%c0_2, %c0_3] : memref<8x128xf32, #tpu.memory_space<vmem>>, vector<8x128xf32>
    %3 = vector.extract_strided_slice %2 {offsets = [0, 0], sizes = [1, 128], strides = [1, 1]} : vector<8x128xf32> to vector<1x128xf32>
    %4 = vector.extract_strided_slice %2 {offsets = [1, 0], sizes = [1, 128], strides = [1, 1]} : vector<8x128xf32> to vector<1x128xf32>
    %5 = vector.extract_strided_slice %2 {offsets = [2, 0], sizes = [1, 128], strides = [1, 1]} : vector<8x128xf32> to vector<1x128xf32>
    %6 = vector.extract_strided_slice %2 {offsets = [3, 0], sizes = [1, 128], strides = [1, 1]} : vector<8x128xf32> to vector<1x128xf32>
    %7 = vector.extract_strided_slice %2 {offsets = [4, 0], sizes = [1, 128], strides = [1, 1]} : vector<8x128xf32> to vector<1x128xf32>
    %8 = vector.extract_strided_slice %2 {offsets = [5, 0], sizes = [1, 128], strides = [1, 1]} : vector<8x128xf32> to vector<1x128xf32>
    %c0_4 = arith.constant 0 : index
    %c0_5 = arith.constant 0 : index
    %9 = vector.load %arg5[%c0_4, %c0_5] : memref<129x128xf32, #tpu.memory_space<vmem>>, vector<128x128xf32>
    %c128 = arith.constant 128 : index
    %c0_6 = arith.constant 0 : index
    %10 = vector.load %arg5[%c128, %c0_6] : memref<129x128xf32, #tpu.memory_space<vmem>>, vector<1x128xf32>
    %11 = tpu.iota {dimensions = array<i32: 1>} : vector<1x128xi32>
    %c32_i32 = arith.constant 32 : i32
    %12 = vector.broadcast %c32_i32 : i32 to vector<1x128xi32>
    %13 = arith.cmpi slt, %11, %12 : vector<1x128xi32>
    %c0_7 = arith.constant 0 : index
    %c0_8 = arith.constant 0 : index
    %14 = vector.load %arg1[%c0_7, %c0_8] : memref<8x16xf32, #tpu.memory_space<vmem>>, vector<8x16xf32>
    %cst = arith.constant dense<0.000000e+00> : vector<8x128xf32>
    %15 = tpu.matmul %14, %0, %cst {dimension_numbers = #tpu.dot_dimension_numbers<[1], [0], [0], [1], [0, 0, 1, 1], [], []>} : vector<8x16xf32>, vector<16x128xf32>, vector<8x128xf32> -> vector<8x128xf32>
    %16 = vector.broadcast %3 : vector<1x128xf32> to vector<8x128xf32>
    %17 = arith.addf %15, %16 : vector<8x128xf32>
    %cst_9 = arith.constant dense<0.000000e+00> : vector<8xf32>
    %18 = vector.multi_reduction <add>, %17, %cst_9 [1] : vector<8x128xf32> to vector<8xf32>
    %19 = vector.shape_cast %18 : vector<8xf32> to vector<8x1xf32>
    %cst_10 = arith.constant 3.125000e-02 : f32
    %20 = vector.broadcast %cst_10 : f32 to vector<8x1xf32>
    %21 = arith.mulf %19, %20 : vector<8x1xf32>
    %22 = vector.broadcast %21 : vector<8x1xf32> to vector<8x128xf32>
    %23 = arith.subf %17, %22 : vector<8x128xf32>
    %cst_11 = arith.constant 0.000000e+00 : f32
    %24 = vector.shape_cast %13 : vector<1x128xi1> to vector<1x128xi1>
    %25 = vector.broadcast %24 : vector<1x128xi1> to vector<8x128xi1>
    %26 = vector.broadcast %cst_11 : f32 to vector<8x128xf32>
    %27 = arith.select %25, %23, %26 : vector<8x128xi1>, vector<8x128xf32>
    %28 = arith.mulf %27, %27 : vector<8x128xf32>
    %cst_12 = arith.constant dense<0.000000e+00> : vector<8xf32>
    %29 = vector.multi_reduction <add>, %28, %cst_12 [1] : vector<8x128xf32> to vector<8xf32>
    %30 = vector.shape_cast %29 : vector<8xf32> to vector<8x1xf32>
    %cst_13 = arith.constant 3.125000e-02 : f32
    %31 = vector.broadcast %cst_13 : f32 to vector<8x1xf32>
    %32 = arith.mulf %30, %31 : vector<8x1xf32>
    %cst_14 = arith.constant 9.99999974E-6 : f32
    %33 = vector.broadcast %cst_14 : f32 to vector<8x1xf32>
    %34 = arith.addf %32, %33 : vector<8x1xf32>
    %35 = math.rsqrt %34 : vector<8x1xf32>
    %36 = vector.broadcast %35 : vector<8x1xf32> to vector<8x128xf32>
    %37 = arith.mulf %27, %36 : vector<8x128xf32>
    %38 = vector.broadcast %4 : vector<1x128xf32> to vector<8x128xf32>
    %39 = arith.mulf %37, %38 : vector<8x128xf32>
    %40 = vector.broadcast %5 : vector<1x128xf32> to vector<8x128xf32>
    %41 = arith.addf %39, %40 : vector<8x128xf32>
    %cst_15 = arith.constant 0.000000e+00 : f32
    %42 = vector.broadcast %cst_15 : f32 to vector<8x128xf32>
    %43 = arith.maximumf %41, %42 : vector<8x128xf32>
    %cst_16 = arith.constant dense<0.000000e+00> : vector<8x128xf32>
    %44 = tpu.matmul %43, %1, %cst_16 {dimension_numbers = #tpu.dot_dimension_numbers<[1], [0], [0], [1], [0, 0, 1, 1], [], []>} : vector<8x128xf32>, vector<128x128xf32>, vector<8x128xf32> -> vector<8x128xf32>
    %45 = vector.broadcast %6 : vector<1x128xf32> to vector<8x128xf32>
    %46 = arith.addf %44, %45 : vector<8x128xf32>
    %cst_17 = arith.constant dense<0.000000e+00> : vector<8xf32>
    %47 = vector.multi_reduction <add>, %46, %cst_17 [1] : vector<8x128xf32> to vector<8xf32>
    %48 = vector.shape_cast %47 : vector<8xf32> to vector<8x1xf32>
    %cst_18 = arith.constant 3.125000e-02 : f32
    %49 = vector.broadcast %cst_18 : f32 to vector<8x1xf32>
    %50 = arith.mulf %48, %49 : vector<8x1xf32>
    %51 = vector.broadcast %50 : vector<8x1xf32> to vector<8x128xf32>
    %52 = arith.subf %46, %51 : vector<8x128xf32>
    %cst_19 = arith.constant 0.000000e+00 : f32
    %53 = vector.shape_cast %13 : vector<1x128xi1> to vector<1x128xi1>
    %54 = vector.broadcast %53 : vector<1x128xi1> to vector<8x128xi1>
    %55 = vector.broadcast %cst_19 : f32 to vector<8x128xf32>
    %56 = arith.select %54, %52, %55 : vector<8x128xi1>, vector<8x128xf32>
    %57 = arith.mulf %56, %56 : vector<8x128xf32>
    %cst_20 = arith.constant dense<0.000000e+00> : vector<8xf32>
    %58 = vector.multi_reduction <add>, %57, %cst_20 [1] : vector<8x128xf32> to vector<8xf32>
    %59 = vector.shape_cast %58 : vector<8xf32> to vector<8x1xf32>
    %cst_21 = arith.constant 3.125000e-02 : f32
    %60 = vector.broadcast %cst_21 : f32 to vector<8x1xf32>
    %61 = arith.mulf %59, %60 : vector<8x1xf32>
    %cst_22 = arith.constant 9.99999974E-6 : f32
    %62 = vector.broadcast %cst_22 : f32 to vector<8x1xf32>
    %63 = arith.addf %61, %62 : vector<8x1xf32>
    %64 = math.rsqrt %63 : vector<8x1xf32>
    %65 = vector.broadcast %64 : vector<8x1xf32> to vector<8x128xf32>
    %66 = arith.mulf %56, %65 : vector<8x128xf32>
    %67 = vector.broadcast %7 : vector<1x128xf32> to vector<8x128xf32>
    %68 = arith.mulf %66, %67 : vector<8x128xf32>
    %69 = vector.broadcast %8 : vector<1x128xf32> to vector<8x128xf32>
    %70 = arith.addf %68, %69 : vector<8x128xf32>
    %cst_23 = arith.constant 0.000000e+00 : f32
    %71 = vector.broadcast %cst_23 : f32 to vector<8x128xf32>
    %72 = arith.maximumf %70, %71 : vector<8x128xf32>
    %cst_24 = arith.constant dense<0.000000e+00> : vector<8x128xf32>
    %73 = tpu.matmul %72, %9, %cst_24 {dimension_numbers = #tpu.dot_dimension_numbers<[1], [0], [0], [1], [0, 0, 1, 1], [], []>} : vector<8x128xf32>, vector<128x128xf32>, vector<8x128xf32> -> vector<8x128xf32>
    %74 = vector.broadcast %10 : vector<1x128xf32> to vector<8x128xf32>
    %75 = arith.addf %73, %74 : vector<8x128xf32>
    %c0_25 = arith.constant 0 : index
    %c0_26 = arith.constant 0 : index
    %76 = vector.load %arg2[%c0_25, %c0_26] : memref<8x128xi8, #tpu.memory_space<vmem>>, vector<8x128xi8>
    %c0_i8 = arith.constant 0 : i8
    %77 = vector.broadcast %c0_i8 : i8 to vector<8x128xi8>
    %78 = arith.cmpi ne, %76, %77 : vector<8x128xi8>
    %cst_27 = arith.constant -3.40282347E+38 : f32
    %79 = vector.broadcast %cst_27 : f32 to vector<8x128xf32>
    %80 = arith.select %78, %75, %79 : vector<8x128xi1>, vector<8x128xf32>
    %81 = tpu.iota {dimensions = array<i32: 1>} : vector<1x128xi32>
    %c12_i32 = arith.constant 12 : i32
    %82 = vector.broadcast %c12_i32 : i32 to vector<1x128xi32>
    %83 = arith.cmpi slt, %81, %82 : vector<1x128xi32>
    %cst_28 = arith.constant 0xFF800000 : f32
    %84 = vector.shape_cast %83 : vector<1x128xi1> to vector<1x128xi1>
    %85 = vector.broadcast %84 : vector<1x128xi1> to vector<8x128xi1>
    %86 = vector.broadcast %cst_28 : f32 to vector<8x128xf32>
    %87 = arith.select %85, %80, %86 : vector<8x128xi1>, vector<8x128xf32>
    %cst_29 = arith.constant dense<0xFF800000> : vector<8xf32>
    %88 = vector.multi_reduction <maximumf>, %87, %cst_29 [1] : vector<8x128xf32> to vector<8xf32>
    %89 = vector.shape_cast %88 : vector<8xf32> to vector<8x1xf32>
    %90 = vector.broadcast %89 : vector<8x1xf32> to vector<8x128xf32>
    %91 = arith.subf %87, %90 : vector<8x128xf32>
    %92 = math.exp %91 : vector<8x128xf32>
    %cst_30 = arith.constant dense<0.000000e+00> : vector<8xf32>
    %93 = vector.multi_reduction <add>, %92, %cst_30 [1] : vector<8x128xf32> to vector<8xf32>
    %94 = vector.shape_cast %93 : vector<8xf32> to vector<8x1xf32>
    %95 = tpu.reciprocal %94 {approx = true} : vector<8x1xf32> -> vector<8x1xf32>
    %96 = vector.broadcast %95 : vector<8x1xf32> to vector<8x128xf32>
    %97 = arith.mulf %92, %96 : vector<8x128xf32>
    %c0_31 = arith.constant 0 : index
    %c0_32 = arith.constant 0 : index
    %98 = vector.load %arg6[%c0_31, %c0_32] : memref<8x128xf32, #tpu.memory_space<vmem>>, vector<8x128xf32>
    tpu.vector_store %arg6[%c0_31, %c0_32], %97 {strides = array<i32>} : memref<8x128xf32, #tpu.memory_space<vmem>>, vector<8x128xf32>,
    return
  }
  func.func @transform_0(%arg0: i32) -> (i32, i32) {
    %c0_i32 = arith.constant 0 : i32
    %c0_i32_0 = arith.constant 0 : i32
    return %arg0, %c0_i32 : i32, i32
  }
  func.func @transform_1(%arg0: i32) -> (i32, i32) {
    %c0_i32 = arith.constant 0 : i32
    %c0_i32_0 = arith.constant 0 : i32
    return %arg0, %c0_i32 : i32, i32
  }
  func.func @transform_2(%arg0: i32) -> (i32, i32) {
    %c0_i32 = arith.constant 0 : i32
    %c0_i32_0 = arith.constant 0 : i32
    %c0_i32_1 = arith.constant 0 : i32
    return %c0_i32, %c0_i32_0 : i32, i32
  }
  func.func @transform_3(%arg0: i32) -> (i32, i32) {
    %c0_i32 = arith.constant 0 : i32
    %c0_i32_0 = arith.constant 0 : i32
    %c0_i32_1 = arith.constant 0 : i32
    return %c0_i32, %c0_i32_0 : i32, i32
  }
  func.func @transform_4(%arg0: i32) -> (i32, i32) {
    %c0_i32 = arith.constant 0 : i32
    %c0_i32_0 = arith.constant 0 : i32
    %c0_i32_1 = arith.constant 0 : i32
    return %c0_i32, %c0_i32_0 : i32, i32
  }
  func.func @transform_5(%arg0: i32) -> (i32, i32) {
    %c0_i32 = arith.constant 0 : i32
    %c0_i32_0 = arith.constant 0 : i32
    return %arg0, %c0_i32 : i32, i32
  }
}

</mosaic_0001>

<llo_original>
// kernel: tpu_custom_call.1
$region0: #{tpu_custom_call.1}
  #allocation0 [shape = 'u32[]', space=smem, size = 0x4, offset = 0x4, fixed_abs, tag = 'smem constant byte address 0x4 - core index']
  #allocation1 [shape = 'u32[144,128]{1,0:T(1,128)}', space=vmem, size = 0x12000, scoped, tag = 'internal scratch']
  %s0 = inlined_call_operand.hbm [shape: f32[8,16], index: 0, kind: input, shape index: {}]
  %s1 = inlined_call_operand.vmem [shape: s8[8,128], index: 1, kind: input, shape index: {}]
  %s2 = inlined_call_operand.hbm [shape: f32[144,128], index: 2, kind: input, shape index: {}]
  %s3 = inlined_call_operand.vmem [shape: f32[8,128], index: 3, kind: input, shape index: {}]
  %s4 = inlined_call_operand.hbm [shape: f32[129,128], index: 4, kind: input, shape index: {}]
  %s5 = inlined_call_operand.hbm [shape: f32[8,128], index: 5, kind: output, shape index: {}]
  %s6 = sld [smem:[#allocation0]]
  $region42: #{tpu_custom_call.1} parent=0
    _
  %s8 = ssub.s32 1, %s6
  %s9 = scalar_select 0, %s8, %s6
  $region1: #{tpu_custom_call.1} parent=0
    #allocation2 [shape = 'u8[4096]{0}', space=vmem, size = 0x1000, scoped, tag = 'input window, operand 0, single buffered']
    #allocation3 [shape = 's32[1]{0}', space=sflag, size = 0x4, scoped, tag = 'scoped memory for tpu_custom_call.1']
    #allocation4 [shape = 's32[1]{0}', space=sflag, size = 0x4, scoped, tag = 'scoped memory for tpu_custom_call.1']
    #allocation5 [shape = 'u8[73728]{0}', space=vmem, size = 0x12000, scoped, tag = 'input window, operand 2, single buffered']
    #allocation6 [shape = 's32[1]{0}', space=sflag, size = 0x4, scoped, tag = 'scoped memory for tpu_custom_call.1']
    #allocation7 [shape = 'u8[69632]{0}', space=vmem, size = 0x11000, scoped, tag = 'input window, operand 4, single buffered']
    #allocation8 [shape = 'u8[4096]{0}', space=vmem, size = 0x1000, scoped, tag = 'output window, operand 0, single buffered']
    %10 = vsyncpa [#allocation3], 0
    %11 = vsyncpa [#allocation6], 0
    %12 = vsyncpa [#allocation4], 0
    // Predicated region
    $region2: #{tpu_custom_call.1} parent=1 // pred_check
      _
    $region3: #{tpu_custom_call.1} parent=1 // pred_check_branch
      %14 = sbr.rel (0) target = $region5
    $region4: #{tpu_custom_call.1} parent=1 // pred_region
      %s16 = ssub.s32 128, 128
      %17 = vsyncadd [#allocation3], %s16
      %s19 = sshll.u32 [#allocation2], 4
      %s20 = int_to_ptr.vmem [resolvable:$true] %s19
      %22 = dma.hbm_to_vmem [thread:$0]  %s0, 128, %s20, [#allocation3]
    $region5: #{tpu_custom_call.1} parent=1 // pred_fallthru
      _
    // Predicated region
    $region6: #{tpu_custom_call.1} parent=1 // pred_check
      _
    $region7: #{tpu_custom_call.1} parent=1 // pred_check_branch
      %24 = sbr.rel (0) target = $region9
    $region8: #{tpu_custom_call.1} parent=1 // pred_region
      _
    $region9: #{tpu_custom_call.1} parent=1 // pred_fallthru
      _
    // Predicated region
    $region10: #{tpu_custom_call.1} parent=1 // pred_check
      _
    $region11: #{tpu_custom_call.1} parent=1 // pred_check_branch
      %26 = sbr.rel (0) target = $region13
    $region12: #{tpu_custom_call.1} parent=1 // pred_region
      %s28 = ssub.s32 2304, 2304
      %29 = vsyncadd [#allocation6], %s28
      %s30 = sshll.u32 [#allocation5], 4
      %s31 = int_to_ptr.vmem [resolvable:$true] %s30
      %36 = dma.hbm_to_vmem [thread:$0]  %s2, 2304, %s31, [#allocation6], 128, 128, 8
    $region13: #{tpu_custom_call.1} parent=1 // pred_fallthru
      _
    // Predicated region
    $region14: #{tpu_custom_call.1} parent=1 // pred_check
      _
    $region15: #{tpu_custom_call.1} parent=1 // pred_check_branch
      %38 = sbr.rel (0) target = $region17
    $region16: #{tpu_custom_call.1} parent=1 // pred_region
      _
    $region17: #{tpu_custom_call.1} parent=1 // pred_fallthru
      _
    // Predicated region
    $region18: #{tpu_custom_call.1} parent=1 // pred_check
      _
    $region19: #{tpu_custom_call.1} parent=1 // pred_check_branch
      %40 = sbr.rel (0) target = $region21
    $region20: #{tpu_custom_call.1} parent=1 // pred_region
      %s42 = ssub.s32 2176, 2176
      %43 = vsyncadd [#allocation6], %s42
      %s44 = sshll.u32 [#allocation7], 4
      %s45 = int_to_ptr.vmem [resolvable:$true] %s44
      %50 = dma.hbm_to_vmem [thread:$0]  %s4, 2176, %s45, [#allocation6], 128, 128, 8
    $region21: #{tpu_custom_call.1} parent=1 // pred_fallthru
      _
    // Predicated region
    $region22: #{tpu_custom_call.1} parent=1 // pred_check
      _
    $region23: #{tpu_custom_call.1} parent=1 // pred_check_branch
      %52 = sbr.rel (0) target = $region25
    $region24: #{tpu_custom_call.1} parent=1 // pred_region
      %53 = dma.done [#allocation3], 128
    $region25: #{tpu_custom_call.1} parent=1 // pred_fallthru
      _
    // Predicated region
    $region26: #{tpu_custom_call.1} parent=1 // pred_check
      _
    $region27: #{tpu_custom_call.1} parent=1 // pred_check_branch
      %55 = sbr.rel (0) target = $region29
    $region28: #{tpu_custom_call.1} parent=1 // pred_region
      %56 = dma.done [#allocation6], 2304
    $region29: #{tpu_custom_call.1} parent=1 // pred_fallthru
      _
    // Predicated region
    $region30: #{tpu_custom_call.1} parent=1 // pred_check
      _
    $region31: #{tpu_custom_call.1} parent=1 // pred_check_branch
      %58 = sbr.rel (0) target = $region33
    $region32: #{tpu_custom_call.1} parent=1 // pred_region
      %59 = dma.done [#allocation6], 2176
    $region33: #{tpu_custom_call.1} parent=1 // pred_fallthru
      _
    %v62 = vld [vmem:[#allocation5] sm:$0xff]
    %v63 = vld [vmem:[#allocation5 + $0x8] sm:$0xff]
    %v64 = vld [vmem:[#allocation5 + $0x10] sm:$0xff]
    %v65 = vld [vmem:[#allocation5 + $0x18] sm:$0xff]
    %v66 = vld [vmem:[#allocation5 + $0x20] sm:$0xff]
    %v67 = vld [vmem:[#allocation5 + $0x28] sm:$0xff]
    %v68 = vld [vmem:[#allocation5 + $0x30] sm:$0xff]
    %v69 = vld [vmem:[#allocation5 + $0x38] sm:$0xff]
    %v70 = vld [vmem:[#allocation5 + $0x40] sm:$0xff]
    %v71 = vld [vmem:[#allocation5 + $0x48] sm:$0xff]
    %v72 = vld [vmem:[#allocation5 + $0x50] sm:$0xff]
    %v73 = vld [vmem:[#allocation5 + $0x58] sm:$0xff]
    %v74 = vld [vmem:[#allocation5 + $0x60] sm:$0xff]
    %v75 = vld [vmem:[#allocation5 + $0x68] sm:$0xff]
    %v76 = vld [vmem:[#allocation5 + $0x70] sm:$0xff]
    %v77 = vld [vmem:[#allocation5 + $0x78] sm:$0xff]
    %v78 = vld [vmem:[#allocation5 + $0x80] sm:$0xff]
    %v79 = vld [vmem:[#allocation5 + $0x88] sm:$0xff]
    %v80 = vld [vmem:[%s3] sm:$0xff]
    %v81 = vld [vmem:[#allocation7] sm:$0xff]
    %v82 = vld [vmem:[#allocation7 + $0x8] sm:$0xff]
    %v83 = vld [vmem:[#allocation7 + $0x10] sm:$0xff]
    %v84 = vld [vmem:[#allocation7 + $0x18] sm:$0xff]
    %v85 = vld [vmem:[#allocation7 + $0x20] sm:$0xff]
    %v86 = vld [vmem:[#allocation7 + $0x28] sm:$0xff]
    %v87 = vld [vmem:[#allocation7 + $0x30] sm:$0xff]
    %v88 = vld [vmem:[#allocation7 + $0x38] sm:$0xff]
    %v89 = vld [vmem:[#allocation7 + $0x40] sm:$0xff]
    %v90 = vld [vmem:[#allocation7 + $0x48] sm:$0xff]
    %v91 = vld [vmem:[#allocation7 + $0x50] sm:$0xff]
    %v92 = vld [vmem:[#allocation7 + $0x58] sm:$0xff]
    %v93 = vld [vmem:[#allocation7 + $0x60] sm:$0xff]
    %v94 = vld [vmem:[#allocation7 + $0x68] sm:$0xff]
    %v95 = vld [vmem:[#allocation7 + $0x70] sm:$0xff]
    %v96 = vld [vmem:[#allocation7 + $0x78] sm:$0xff]
    %v97 = vld [vmem:[#allocation7 + $0x80] sm:$0x1]
    %v98 = vlaneseq
    %v99 = vand.u32 %v98, 127
    %vm100 = vcmp.lt.s32.totalorder %v99, 32
    %v101 = vld [vmem:[#allocation2] sm:$0xff]
    %v102 = vlaneseq
    %v103 = vshrl.u32 %v102, 7
    %v104 = vsub.s32 0, %v103
    %v105 = vrot.slane %v80, %v104
    %vm106 = vcmask 130048
    %v108 = vsel %vm106, %v101, 0
    %110 = vmatprep.subr.mxu0 0.0
    %111 = vmatpush1.msra.mxu0 %v62
    %112 = vmatprep.subr.mxu0 0.0
    %113 = vmatpush1.msra.mxu0 %v63
    %114 = vmatprep.subr.mxu0 0.0
    %115 = vmatpush1.msra.mxu0 0.0
    %116 = vmatprep.subr.mxu0 0.0
    %117 = vmatpush1.msra.mxu0 0.0
    %118 = vmatprep.subr.mxu0 0.0
    %119 = vmatpush1.msra.mxu0 0.0
    %120 = vmatprep.subr.mxu0 0.0
    %121 = vmatpush1.msra.mxu0 0.0
    %122 = vmatprep.subr.mxu0 0.0
    %123 = vmatpush1.msra.mxu0 0.0
    %124 = vmatprep.subr.mxu0 0.0
    %125 = vmatpush1.msra.mxu0 0.0
    %126 = vmatprep.subr.mxu0 0.0
    %127 = vmatpush1.msra.mxu0 0.0
    %128 = vmatprep.subr.mxu0 0.0
    %129 = vmatpush1.msra.mxu0 0.0
    %130 = vmatprep.subr.mxu0 0.0
    %131 = vmatpush1.msra.mxu0 0.0
    %132 = vmatprep.subr.mxu0 0.0
    %133 = vmatpush1.msra.mxu0 0.0
    %134 = vmatprep.subr.mxu0 0.0
    %135 = vmatpush1.msra.mxu0 0.0
    %136 = vmatprep.subr.mxu0 0.0
    %137 = vmatpush1.msra.mxu0 0.0
    %138 = vmatprep.subr.mxu0 0.0
    %139 = vmatpush1.msra.mxu0 0.0
    %140 = vmatprep.subr.mxu0 0.0
    %141 = vmatpush1.msra.mxu0 0.0
    %142 = vmatprep.subr.mxu0 0.0
    %143 = vmatpush1.msra.mxu0 0.0
    %144 = vmatprep.subr.mxu0 0.0
    %145 = vmatpush1.msra.mxu0 0.0
    %146 = vmatprep.subr.mxu0 0.0
    %147 = vmatpush1.msra.mxu0 0.0
    %148 = vmatprep.subr.mxu0 0.0
    %149 = vmatpush1.msra.mxu0 0.0
    %150 = vmatprep.subr.mxu0 0.0
    %151 = vmatpush1.msra.mxu0 0.0
    %152 = vmatprep.subr.mxu0 0.0
    %153 = vmatpush1.msra.mxu0 0.0
    %154 = vmatprep.subr.mxu0 0.0
    %155 = vmatpush1.msra.mxu0 0.0
    %156 = vmatprep.subr.mxu0 0.0
    %157 = vmatpush1.msra.mxu0 0.0
    %158 = vmatprep.subr.mxu0 0.0
    %159 = vmatpush1.msra.mxu0 0.0
    %160 = vmatprep.subr.mxu0 0.0
    %161 = vmatpush1.msra.mxu0 0.0
    %162 = vmatprep.subr.mxu0 0.0
    %163 = vmatpush1.msra.mxu0 0.0
    %164 = vmatprep.subr.mxu0 0.0
    %165 = vmatpush1.msra.mxu0 0.0
    %166 = vmatprep.subr.mxu0 0.0
    %167 = vmatpush1.msra.mxu0 0.0
    %168 = vmatprep.subr.mxu0 0.0
    %169 = vmatpush1.msra.mxu0 0.0
    %170 = vmatprep.subr.mxu0 0.0
    %171 = vmatpush1.msra.mxu0 0.0
    %172 = vmatprep.subr.mxu0 0.0
    %173 = vmatpush1.msra.mxu0 0.0
    %174 = vmatprep.mubr.f32.mxu0 0.0
    %175 = vmatmul.mubr.f32.gmra.mrb[0].mxu0 %v108
    %v176 = vpop.f32.mrb[0].mxu0
    %v177 = vadd.f32 %v105, %v176
    %v178 = vpop.f32.mrb[0].mxu0
    %179 = vdwg.mxu0
    %180 = vadd.xlane.f32.xlu0 %v177
    %v181 = vpop.xlane.xlu0 %180
    %v182 = vmul.f32 %v181, 0.03125
    %v183 = vsub.f32 %v177, %v182
    %v184 = vsel %vm100, 1, 0
    %vm185 = vcmp.eq.s32.totalorder %v184, 1
    %v186 = vsel %vm185, %v183, 0.0
    %v187 = vmul.f32 %v186, %v186
    %188 = vadd.xlane.f32.xlu0 %v187
    %v189 = vpop.xlane.xlu0 %188
    %v190 = vmul.f32 %v189, 0.03125
    %v191 = vadd.f32 %v190, 1e-05
    %v192 = vrsqrt.pop %v191
    %v193 = vmul.f32 %v186, %v192
    %v194 = vlaneseq
    %v195 = vshrl.u32 %v194, 7
    %v196 = vsub.s32 1, %v195
    %v197 = vrot.slane %v80, %v196
    %v198 = vmul.f32 %v193, %v197
    %v199 = vlaneseq
    %v200 = vshrl.u32 %v199, 7
    %v201 = vsub.s32 2, %v200
    %v202 = vrot.slane %v80, %v201
    %v203 = vadd.f32 %v198, %v202
    %v204 = vmax.f32 %v203, 0.0
    %v205 = vlaneseq
    %v206 = vshrl.u32 %v205, 7
    %v207 = vsub.s32 3, %v206
    %v208 = vrot.slane %v80, %v207
    %209 = vmatprep.subr.mxu0 0.0
    %210 = vmatpush1.msra.mxu0 %v64
    %211 = vmatprep.subr.mxu0 0.0
    %212 = vmatpush1.msra.mxu0 %v65
    %213 = vmatprep.subr.mxu0 0.0
    %214 = vmatpush1.msra.mxu0 %v66
    %215 = vmatprep.subr.mxu0 0.0
    %216 = vmatpush1.msra.mxu0 %v67
    %217 = vmatprep.subr.mxu0 0.0
    %218 = vmatpush1.msra.mxu0 %v68
    %219 = vmatprep.subr.mxu0 0.0
    %220 = vmatpush1.msra.mxu0 %v69
    %221 = vmatprep.subr.mxu0 0.0
    %222 = vmatpush1.msra.mxu0 %v70
    %223 = vmatprep.subr.mxu0 0.0
    %224 = vmatpush1.msra.mxu0 %v71
    %225 = vmatprep.subr.mxu0 0.0
    %226 = vmatpush1.msra.mxu0 %v72
    %227 = vmatprep.subr.mxu0 0.0
    %228 = vmatpush1.msra.mxu0 %v73
    %229 = vmatprep.subr.mxu0 0.0
    %230 = vmatpush1.msra.mxu0 %v74
    %231 = vmatprep.subr.mxu0 0.0
    %232 = vmatpush1.msra.mxu0 %v75
    %233 = vmatprep.subr.mxu0 0.0
    %234 = vmatpush1.msra.mxu0 %v76
    %235 = vmatprep.subr.mxu0 0.0
    %236 = vmatpush1.msra.mxu0 %v77
    %237 = vmatprep.subr.mxu0 0.0
    %238 = vmatpush1.msra.mxu0 %v78
    %239 = vmatprep.subr.mxu0 0.0
    %240 = vmatpush1.msra.mxu0 %v79
    %241 = vmatprep.subr.mxu0 0.0
    %242 = vmatpush1.msra.mxu0 0.0
    %243 = vmatprep.subr.mxu0 0.0
    %244 = vmatpush1.msra.mxu0 0.0
    %245 = vmatprep.subr.mxu0 0.0
    %246 = vmatpush1.msra.mxu0 0.0
    %247 = vmatprep.subr.mxu0 0.0
    %248 = vmatpush1.msra.mxu0 0.0
    %249 = vmatprep.subr.mxu0 0.0
    %250 = vmatpush1.msra.mxu0 0.0
    %251 = vmatprep.subr.mxu0 0.0
    %252 = vmatpush1.msra.mxu0 0.0
    %253 = vmatprep.subr.mxu0 0.0
    %254 = vmatpush1.msra.mxu0 0.0
    %255 = vmatprep.subr.mxu0 0.0
    %256 = vmatpush1.msra.mxu0 0.0
    %257 = vmatprep.subr.mxu0 0.0
    %258 = vmatpush1.msra.mxu0 0.0
    %259 = vmatprep.subr.mxu0 0.0
    %260 = vmatpush1.msra.mxu0 0.0
    %261 = vmatprep.subr.mxu0 0.0
    %262 = vmatpush1.msra.mxu0 0.0
    %263 = vmatprep.subr.mxu0 0.0
    %264 = vmatpush1.msra.mxu0 0.0
    %265 = vmatprep.subr.mxu0 0.0
    %266 = vmatpush1.msra.mxu0 0.0
    %267 = vmatprep.subr.mxu0 0.0
    %268 = vmatpush1.msra.mxu0 0.0
    %269 = vmatprep.subr.mxu0 0.0
    %270 = vmatpush1.msra.mxu0 0.0
    %271 = vmatprep.subr.mxu0 0.0
    %272 = vmatpush1.msra.mxu0 0.0
    %273 = vmatprep.mubr.f32.mxu0 0.0
    %274 = vmatmul.mubr.f32.gmra.mrb[0].mxu0 %v204
    %v275 = vpop.f32.mrb[0].mxu0
    %v276 = vadd.f32 %v208, %v275
    %v277 = vpop.f32.mrb[0].mxu0
    %278 = vdwg.mxu0
    %279 = vadd.xlane.f32.xlu0 %v276
    %v280 = vpop.xlane.xlu0 %279
    %v281 = vmul.f32 %v280, 0.03125
    %v282 = vsub.f32 %v276, %v281
    %v283 = vsel %vm185, %v282, 0.0
    %v284 = vmul.f32 %v283, %v283
    %285 = vadd.xlane.f32.xlu0 %v284
    %v286 = vpop.xlane.xlu0 %285
    %v287 = vmul.f32 %v286, 0.03125
    %v288 = vadd.f32 %v287, 1e-05
    %v289 = vrsqrt.pop %v288
    %v290 = vmul.f32 %v283, %v289
    %v291 = vlaneseq
    %v292 = vshrl.u32 %v291, 7
    %v293 = vsub.s32 4, %v292
    %v294 = vrot.slane %v80, %v293
    %v295 = vmul.f32 %v290, %v294
    %v296 = vlaneseq
    %v297 = vshrl.u32 %v296, 7
    %v298 = vsub.s32 5, %v297
    %v299 = vrot.slane %v80, %v298
    %v300 = vadd.f32 %v295, %v299
    %v301 = vmax.f32 %v300, 0.0
    %v302 = vlaneseq
    %v303 = vshrl.u32 %v302, 7
    %v304 = vsub.s32 0, %v303
    %v305 = vrot.slane %v97, %v304
    %306 = vmatprep.subr.mxu0 0.0
    %307 = vmatpush1.msra.mxu0 %v81
    %308 = vmatprep.subr.mxu0 0.0
    %309 = vmatpush1.msra.mxu0 %v82
    %310 = vmatprep.subr.mxu0 0.0
    %311 = vmatpush1.msra.mxu0 %v83
    %312 = vmatprep.subr.mxu0 0.0
    %313 = vmatpush1.msra.mxu0 %v84
    %314 = vmatprep.subr.mxu0 0.0
    %315 = vmatpush1.msra.mxu0 %v85
    %316 = vmatprep.subr.mxu0 0.0
    %317 = vmatpush1.msra.mxu0 %v86
    %318 = vmatprep.subr.mxu0 0.0
    %319 = vmatpush1.msra.mxu0 %v87
    %320 = vmatprep.subr.mxu0 0.0
    %321 = vmatpush1.msra.mxu0 %v88
    %322 = vmatprep.subr.mxu0 0.0
    %323 = vmatpush1.msra.mxu0 %v89
    %324 = vmatprep.subr.mxu0 0.0
    %325 = vmatpush1.msra.mxu0 %v90
    %326 = vmatprep.subr.mxu0 0.0
    %327 = vmatpush1.msra.mxu0 %v91
    %328 = vmatprep.subr.mxu0 0.0
    %329 = vmatpush1.msra.mxu0 %v92
    %330 = vmatprep.subr.mxu0 0.0
    %331 = vmatpush1.msra.mxu0 %v93
    %332 = vmatprep.subr.mxu0 0.0
    %333 = vmatpush1.msra.mxu0 %v94
    %334 = vmatprep.subr.mxu0 0.0
    %335 = vmatpush1.msra.mxu0 %v95
    %336 = vmatprep.subr.mxu0 0.0
    %337 = vmatpush1.msra.mxu0 %v96
    %338 = vmatprep.subr.mxu0 0.0
    %339 = vmatpush1.msra.mxu0 0.0
    %340 = vmatprep.subr.mxu0 0.0
    %341 = vmatpush1.msra.mxu0 0.0
    %342 = vmatprep.subr.mxu0 0.0
    %343 = vmatpush1.msra.mxu0 0.0
    %344 = vmatprep.subr.mxu0 0.0
    %345 = vmatpush1.msra.mxu0 0.0
    %346 = vmatprep.subr.mxu0 0.0
    %347 = vmatpush1.msra.mxu0 0.0
    %348 = vmatprep.subr.mxu0 0.0
    %349 = vmatpush1.msra.mxu0 0.0
    %350 = vmatprep.subr.mxu0 0.0
    %351 = vmatpush1.msra.mxu0 0.0
    %352 = vmatprep.subr.mxu0 0.0
    %353 = vmatpush1.msra.mxu0 0.0
    %354 = vmatprep.subr.mxu0 0.0
    %355 = vmatpush1.msra.mxu0 0.0
    %356 = vmatprep.subr.mxu0 0.0
    %357 = vmatpush1.msra.mxu0 0.0
    %358 = vmatprep.subr.mxu0 0.0
    %359 = vmatpush1.msra.mxu0 0.0
    %360 = vmatprep.subr.mxu0 0.0
    %361 = vmatpush1.msra.mxu0 0.0
    %362 = vmatprep.subr.mxu0 0.0
    %363 = vmatpush1.msra.mxu0 0.0
    %364 = vmatprep.subr.mxu0 0.0
    %365 = vmatpush1.msra.mxu0 0.0
    %366 = vmatprep.subr.mxu0 0.0
    %367 = vmatpush1.msra.mxu0 0.0
    %368 = vmatprep.subr.mxu0 0.0
    %369 = vmatpush1.msra.mxu0 0.0
    %370 = vmatprep.mubr.f32.mxu0 0.0
    %371 = vmatmul.mubr.f32.gmra.mrb[0].mxu0 %v301
    %v372 = vpop.f32.mrb[0].mxu0
    %v373 = vadd.f32 %v305, %v372
    %v374 = vpop.f32.mrb[0].mxu0
    %375 = vdwg.mxu0
    %v376 = vld [vmem:[%s1] sm:$0x3]
    %vm377 = vnez %v376
    %v378 = vsel %vm377, 16843009, 0
    %v379 = vunpack.c.0.s8 %v378
    %vm380 = vcmp.ne.s32.totalorder %v379, 0
    %v381 = vsel %vm380, %v373, -3.4028235e+38
    %vm382 = vcmp.lt.s32.totalorder %v99, 12
    %v383 = vsel %vm382, 1, 0
    %vm384 = vcmp.eq.s32.totalorder %v383, 1
    %v385 = vsel %vm384, %v381, -inf
    %386 = vmax.xlane.f32.xlu0 %v385
    %v387 = vpop.xlane.xlu0 %386
    %v388 = vsub.f32 %v385, %v387
    %v389 = vmul.f32 %v388, 1.442695
    %v390 = vpow.pop %v389
    %391 = vadd.xlane.f32.xlu0 %v390
    %v392 = vpop.xlane.xlu0 %391
    %v393 = vrcp.pop %v392
    %v394 = vmul.f32 %v390, %v393
    %395 = vst [vmem:[#allocation8] sm:$0xff] %v394
    // Predicated region
    $region34: #{tpu_custom_call.1} parent=1 // pred_check
      _
    $region35: #{tpu_custom_call.1} parent=1 // pred_check_branch
      %397 = sbr.rel (0) target = $region37
    $region36: #{tpu_custom_call.1} parent=1 // pred_region
      %s399 = ssub.s32 128, 128
      %400 = vsyncadd [#allocation4], %s399
      %s402 = sshll.u32 [#allocation8], 4
      %s403 = int_to_ptr.vmem [resolvable:$true] %s402
      %405 = dma.vmem_to_hbm [thread:$0]  %s403, 128, %s5, [#allocation4]
    $region37: #{tpu_custom_call.1} parent=1 // pred_fallthru
      _
    // Predicated region
    $region38: #{tpu_custom_call.1} parent=1 // pred_check
      _
    $region39: #{tpu_custom_call.1} parent=1 // pred_check_branch
      %407 = sbr.rel (0) target = $region41
    $region40: #{tpu_custom_call.1} parent=1 // pred_region
      %408 = dma.done [#allocation4], 128
    $region41: #{tpu_custom_call.1} parent=1 // pred_fallthru
      _
    %409 = vsyncpa [#allocation3], 1
    %410 = vsyncpa [#allocation6], 1
    %411 = vsyncpa [#allocation4], 1

</llo_original>
